<compile_context>
chip_gen: v6e
topology: v6e:2x2x1
jax: 0.10.0
libtpu: 0.0.40
codegen_flags: <defaults>
</compile_context>

<pallas_src>
import functools

import jax
import jax.numpy as jnp
from jax.experimental import pallas as pl
from jax.experimental.pallas import tpu as pltpu


def _round_up(x, m):
    return (x + m - 1) // m * m


def _pick_spatial_tile(hw, kp, patch_budget_bytes=24 << 20):
    """Largest spatial tile that divides HW exactly and whose double-buffered
    bf16 patch tile stays within a VMEM budget."""
    for cand in (512, 256, 128, 64, 32, 16, 8):
        if hw % cand == 0 and 2 * cand * kp * 2 <= patch_budget_bytes:
            return cand
    return hw  # fallback: whole spatial extent in one block


# ---------------------------------------------------------------------------
# Pallas kernels
# ---------------------------------------------------------------------------
def conv_relu_pool_kernel(p_ref, w_ref, b_ref, o_ref, acc_ref, *, inv_hw, sub):
    """Fused conv(as matmul) + bias + ReLU + global-average-pool.

    p_ref  : (1, thw, Kp) bf16  im2col patches for one image / spatial tile
    w_ref  : (Kp, Cp)     bf16  conv weights (all output channels resident)
    b_ref  : (1, Cp)      f32   conv bias
    o_ref  : (1, 1, Cp)   f32   pooled output (written on last spatial step)
    acc_ref: (sub, Cp)    f32   running partial sums (VPU adds in the loop)
    """
    s = pl.program_id(1)  # spatial-tile (reduction) axis, innermost

    @pl.when(s == 0)
    def _init():
        acc_ref[...] = jnp.zeros_like(acc_ref)

    x = p_ref[0]                                                       # (thw, Kp) bf16
    t = jnp.dot(x, w_ref[...], preferred_element_type=jnp.float32)     # (thw, Cp) f32
    t = jnp.maximum(t + b_ref[...], 0.0)                               # bias + ReLU
    # Partial pooling: (thw, Cp) -> (thw/sub, sub, Cp) -> (sub, Cp). The reshape
    # is sublane-group aligned, so the per-step reduction is plain vreg adds;
    # the cross-sublane reduce is deferred to finalize.
    acc_ref[...] += jnp.sum(t.reshape(-1, sub, t.shape[-1]), axis=0)

    @pl.when(s == pl.num_programs(1) - 1)
    def _finalize():
        o_ref[0] = jnp.sum(acc_ref[...], axis=0, keepdims=True) * inv_hw


def embed_kernel(f_ref, w_ref, b_ref, o_ref):
    """Linear embed of the pooled features (single grid step).

    f_ref : (B, Cp)  bf16 pooled features (pre-cast in the wrapper)
    w_ref : (Cp, Ep) bf16
    b_ref : (1, Ep)  f32
    o_ref : (B, Ep)  f32
    """
    o_ref[...] = (
        jnp.dot(f_ref[...], w_ref[...], preferred_element_type=jnp.float32)
        + b_ref[...]
    )


# ---------------------------------------------------------------------------
# Wrappers (glue in plain JAX, compute in Pallas)
# ---------------------------------------------------------------------------
def conv_relu_pool_pallas(images, conv_w, conv_b):
    """images: (B, Cin, H, W) NCHW. conv_w: (Cfeat, Cin, K, K). conv_b: (Cfeat,).

    Returns pooled features (B, Cp) f32, zero-padded in channels beyond Cfeat.
    """
    B, Cin, H, W = images.shape
    Cfeat, _, K, _ = conv_w.shape
    pad = K // 2
    HW = H * W
    Kdim = Cin * K * K
    Kp = _round_up(Kdim, 128)   # lane-dense contraction dim
    Cp = _round_up(Cfeat, 128)  # lane-dense output-channel dim

    thw = _pick_spatial_tile(HW, Kp)
    assert HW % thw == 0, "spatial tile must divide H*W so the mean is exact"
    sub = 8 if thw % 8 == 0 else 1

    # --- im2col glue (plain JAX), bf16 from the start --------------------
    xp = jnp.pad(images.astype(jnp.bfloat16),
                 ((0, 0), (0, 0), (pad, pad), (pad, pad)))
    slabs = [xp[:, :, dy:dy + H, dx:dx + W] for dy in range(K) for dx in range(K)]
    patches = jnp.stack(slabs, axis=0)                 # (K*K, B, Cin, H, W)
    patches = jnp.transpose(patches, (1, 3, 4, 2, 0))  # (B, H, W, Cin, K*K)
    patches = patches.reshape(B, HW, Kdim)             # cin outer, (ky,kx) inner
    patches = jnp.pad(patches, ((0, 0), (0, 0), (0, Kp - Kdim)))

    w2 = conv_w.reshape(Cfeat, Kdim).T                 # (Kdim, Cfeat), same flat order
    w2 = jnp.pad(w2, ((0, Kp - Kdim), (0, Cp - Cfeat))).astype(jnp.bfloat16)
    b2 = jnp.pad(conv_b, (0, Cp - Cfeat)).reshape(1, Cp).astype(jnp.float32)

    # All output channels stay resident: patches are read from HBM exactly once.
    # TODO(synk): if Kp*Cp*2 bytes ever exceeds the VMEM budget (huge Cfeat),
    # reintroduce an innermost Cout-tile axis (full-width accumulator scratch,
    # pl.Buffered(1) on the weight spec) instead of re-streaming patches.
    # TODO(synk): if B == 1 on v7x, split the HW axis into an outer "parallel"
    # chunk per TensorCore and combine the per-core partial sums.
    grid = (B, HW // thw)  # (parallel over batch, spatial reduction last)

    # VMEM budget derived from actual double-buffered tile sizes; clamped so it
    # stays legal under v7x's 64 MiB physical VMEM per TensorCore.
    vmem_needed = (2 * thw * Kp * 2      # patches tile, double buffered, bf16
                   + 2 * Kp * Cp * 2     # weights (constant block index)
                   + 2 * Cp * 4          # bias
                   + 2 * Cp * 4          # pooled output block
                   + sub * Cp * 4)       # accumulator scratch
    vmem_limit = int(min(max(vmem_needed + (8 << 20), 32 << 20), 64 << 20))

    flops = 2 * B * HW * Kp * Cp
    bytes_accessed = B * HW * Kp * 2 + Kp * Cp * 2 + Cp * 4 + B * Cp * 4

    pooled = pl.pallas_call(
        functools.partial(conv_relu_pool_kernel, inv_hw=1.0 / HW, sub=sub),
        out_shape=jax.ShapeDtypeStruct((B, 1, Cp), jnp.float32),
        grid_spec=pltpu.PrefetchScalarGridSpec(
            num_scalar_prefetch=0,
            grid=grid,
            in_specs=[
                pl.BlockSpec((1, thw, Kp), lambda b, s: (b, s, 0)),
                pl.BlockSpec((Kp, Cp), lambda b, s: (0, 0)),
                pl.BlockSpec((1, Cp), lambda b, s: (0, 0)),
            ],
            out_specs=pl.BlockSpec((1, 1, Cp), lambda b, s: (b, 0, 0)),
            scratch_shapes=[pltpu.VMEM((sub, Cp), jnp.float32)],
        ),
        compiler_params=pltpu.CompilerParams(
            dimension_semantics=("parallel", "arbitrary"),
            vmem_limit_bytes=vmem_limit,
        ),
        cost_estimate=pl.CostEstimate(
            flops=flops, transcendentals=0, bytes_accessed=bytes_accessed
        ),
    )(patches, w2, b2)

    return pooled.reshape(B, Cp)  # (B, Cp) f32 pooled features


def embed_pallas(pooled, embed_w, embed_b):
    """pooled: (B, Cp) f32. embed_w: (E, Cfeat) PyTorch Linear layout. embed_b: (E,)."""
    B, Cp = pooled.shape
    E, Cfeat = embed_w.shape
    Ep = _round_up(E, 128)

    f = pooled.astype(jnp.bfloat16)                         # cast once, in the wrapper
    w2 = embed_w.T                                          # (Cfeat, E)
    w2 = jnp.pad(w2, ((0, Cp - Cfeat), (0, Ep - E))).astype(jnp.bfloat16)
    b2 = jnp.pad(embed_b, (0, Ep - E)).reshape(1, Ep).astype(jnp.float32)

    out = pl.pallas_call(
        embed_kernel,
        out_shape=jax.ShapeDtypeStruct((B, Ep), jnp.float32),
        grid_spec=pltpu.PrefetchScalarGridSpec(
            num_scalar_prefetch=0,
            grid=(1,),  # whole embed in one step: latency-bound at small B
            in_specs=[
                pl.BlockSpec((B, Cp), lambda n: (0, 0)),
                pl.BlockSpec((Cp, Ep), lambda n: (0, 0)),
                pl.BlockSpec((1, Ep), lambda n: (0, 0)),
            ],
            out_specs=pl.BlockSpec((B, Ep), lambda n: (0, 0)),
        ),
        compiler_params=pltpu.CompilerParams(
            dimension_semantics=("arbitrary",),
        ),
        cost_estimate=pl.CostEstimate(
            flops=2 * B * Cp * Ep,
            transcendentals=0,
            bytes_accessed=B * Cp * 2 + Cp * Ep * 2 + Ep * 4 + B * Ep * 4,
        ),
    )(f, w2, b2)

    return out[:, :E]


def encoder_cnn_forward(images, params):
    """EncoderCNN.forward: conv features -> global avg pool -> flatten -> Linear embed."""
    pooled = conv_relu_pool_pallas(images, params["conv_w"], params["conv_b"])
    return embed_pallas(pooled, params["embed_w"], params["embed_b"])


# ---------------------------------------------------------------------------
# Plain-JAX reference (loose numerical sanity check; conv runs in bf16 on-TPU)
# ---------------------------------------------------------------------------
def encoder_cnn_reference(images, params):
    conv = jax.lax.conv_general_dilated(
        images, params["conv_w"], window_strides=(1, 1), padding="SAME",
        dimension_numbers=("NCHW", "OIHW", "NCHW"))
    conv = jnp.maximum(conv + params["conv_b"][None, :, None, None], 0.0)
    pooled = jnp.mean(conv, axis=(2, 3))                       # (B, Cfeat)
    return pooled @ params["embed_w"].T + params["embed_b"]    # (B, E)


# ---------------------------------------------------------------------------
# Deterministic parameter init + smoke test
# ---------------------------------------------------------------------------
def init_params(key, cin, cfeat, k, embed_size):
    k1, k2, k3, k4 = jax.random.split(key, 4)
    return {
        "conv_w": 0.1 * jax.random.normal(k1, (cfeat, cin, k, k), jnp.float32),
        "conv_b": 0.1 * jax.random.normal(k2, (cfeat,), jnp.float32),
        "embed_w": 0.1 * jax.random.normal(k3, (embed_size, cfeat), jnp.float32),  # PyTorch Linear: (out, in)
        "embed_b": 0.1 * jax.random.normal(k4, (embed_size,), jnp.float32),
    }


if __name__ == "__main__":
    B, Cin, H, W = 2, 3, 16, 16       # small synthetic RGB "images" (NCHW)
    Cfeat = 32                        # stand-in for resnet.fc.in_features (=2048)
    K = 3
    embed_size = 32

    key = jax.random.PRNGKey(0)
    kp, kx = jax.random.split(key)
    params = init_params(kp, Cin, Cfeat, K, embed_size)
    images = jax.random.normal(kx, (B, Cin, H, W), jnp.float32)

    out = encoder_cnn_forward(images, params)
    jax.block_until_ready(out)
    assert out.shape == (B, embed_size) and out.dtype == jnp.float32

    ref = encoder_cnn_reference(images, params)
    assert jnp.allclose(out, ref, atol=1e-2, rtol=1e-2), (
        f"max abs err {jnp.max(jnp.abs(out - ref))}")

    print("KERNEL_OK")
</pallas_src>

<mosaic_0001>
module attributes {stable_mosaic.version = 11 : i64} {
  func.func @conv_relu_pool_kernel(%arg0: i32, %arg1: i32, %arg2: memref<1x256x128xbf16, #tpu.memory_space<vmem>>, %arg3: memref<128x128xbf16, #tpu.memory_space<vmem>>, %arg4: memref<1x128xf32, #tpu.memory_space<vmem>>, %arg5: memref<1x1x128xf32, #tpu.memory_space<vmem>>, %arg6: memref<8x128xf32, #tpu.memory_space<vmem>>) attributes {dimension_semantics = [#tpu.dimension_semantics<parallel>, #tpu.dimension_semantics<arbitrary>], iteration_bounds = array<i64: 2, 1>, scalar_prefetch = 0 : i64, scratch_operands = 1 : i64, tpu.core_type = #tpu.core_type<tc>, window_params = [{transform_indices = @transform_0, window_bounds = array<i64: 1, 256, 128>}, {pipeline_mode = #tpu.pipeline_mode<synchronous>, transform_indices = @transform_1, window_bounds = array<i64: 128, 128>}, {pipeline_mode = #tpu.pipeline_mode<synchronous>, transform_indices = @transform_2, window_bounds = array<i64: 1, 128>}, {transform_indices = @transform_3, window_bounds = array<i64: 1, 1, 128>}]} {
    %c0_i32 = arith.constant 0 : i32
    %0 = arith.cmpi eq, %arg1, %c0_i32 : i32
    %1 = arith.extui %0 : i1 to i32
    %c0_i32_0 = arith.constant 0 : i32
    %2 = arith.cmpi ne, %1, %c0_i32_0 : i32
    scf.if %2 {
      %cst_15 = arith.constant 0.000000e+00 : f32
      %20 = vector.broadcast %cst_15 : f32 to vector<8x128xf32>
      %c0_16 = arith.constant 0 : index
      %c0_17 = arith.constant 0 : index
      %21 = vector.load %arg6[%c0_16, %c0_17] : memref<8x128xf32, #tpu.memory_space<vmem>>, vector<8x128xf32>
      tpu.vector_store %arg6[%c0_16, %c0_17], %20 {strides = array<i32>} : memref<8x128xf32, #tpu.memory_space<vmem>>, vector<8x128xf32>,
    } else {
    }
    %c0 = arith.constant 0 : index
    %c0_1 = arith.constant 0 : index
    %c0_2 = arith.constant 0 : index
    %3 = vector.load %arg2[%c0, %c0_1, %c0_2] : memref<1x256x128xbf16, #tpu.memory_space<vmem>>, vector<1x256x128xbf16>
    %4 = vector.shape_cast %3 : vector<1x256x128xbf16> to vector<256x128xbf16>
    %c0_3 = arith.constant 0 : index
    %c0_4 = arith.constant 0 : index
    %5 = vector.load %arg3[%c0_3, %c0_4] : memref<128x128xbf16, #tpu.memory_space<vmem>>, vector<128x128xbf16>
    %cst = arith.constant dense<0.000000e+00> : vector<256x128xf32>
    %6 = tpu.matmul %4, %5, %cst {dimension_numbers = #tpu.dot_dimension_numbers<[1], [0], [0], [1], [0, 0, 1, 1], [], []>} : vector<256x128xbf16>, vector<128x128xbf16>, vector<256x128xf32> -> vector<256x128xf32>
    %c0_5 = arith.constant 0 : index
    %c0_6 = arith.constant 0 : index
    %7 = vector.load %arg4[%c0_5, %c0_6] : memref<1x128xf32, #tpu.memory_space<vmem>>, vector<1x128xf32>
    %8 = vector.broadcast %7 : vector<1x128xf32> to vector<256x128xf32>
    %9 = arith.addf %6, %8 : vector<256x128xf32>
    %cst_7 = arith.constant 0.000000e+00 : f32
    %10 = vector.broadcast %cst_7 : f32 to vector<256x128xf32>
    %11 = arith.maximumf %9, %10 : vector<256x128xf32>
    %c0_8 = arith.constant 0 : index
    %c0_9 = arith.constant 0 : index
    %12 = vector.load %arg6[%c0_8, %c0_9] : memref<8x128xf32, #tpu.memory_space<vmem>>, vector<8x128xf32>
    %13 = vector.shape_cast %11 : vector<256x128xf32> to vector<32x8x128xf32>
    %cst_10 = arith.constant dense<0.000000e+00> : vector<8x128xf32>
    %14 = vector.multi_reduction <add>, %13, %cst_10 [0] : vector<32x8x128xf32> to vector<8x128xf32>
    %15 = arith.addf %12, %14 : vector<8x128xf32>
    %c0_11 = arith.constant 0 : index
    %c0_12 = arith.constant 0 : index
    %16 = vector.load %arg6[%c0_11, %c0_12] : memref<8x128xf32, #tpu.memory_space<vmem>>, vector<8x128xf32>
    tpu.vector_store %arg6[%c0_11, %c0_12], %15 {strides = array<i32>} : memref<8x128xf32, #tpu.memory_space<vmem>>, vector<8x128xf32>,
    %c0_i32_13 = arith.constant 0 : i32
    %17 = arith.cmpi eq, %arg1, %c0_i32_13 : i32
    %18 = arith.extui %17 : i1 to i32
    %c0_i32_14 = arith.constant 0 : i32
    %19 = arith.cmpi ne, %18, %c0_i32_14 : i32
    scf.if %19 {
      %c0_15 = arith.constant 0 : index
      %c0_16 = arith.constant 0 : index
      %20 = vector.load %arg6[%c0_15, %c0_16] : memref<8x128xf32, #tpu.memory_space<vmem>>, vector<8x128xf32>
      %cst_17 = arith.constant dense<0.000000e+00> : vector<128xf32>
      %21 = vector.multi_reduction <add>, %20, %cst_17 [0] : vector<8x128xf32> to vector<128xf32>
      %22 = vector.shape_cast %21 : vector<128xf32> to vector<1x128xf32>
      %cst_18 = arith.constant 3.906250e-03 : f32
      %23 = vector.broadcast %cst_18 : f32 to vector<1x128xf32>
      %24 = arith.mulf %22, %23 : vector<1x128xf32>
      %c0_19 = arith.constant 0 : index
      %c0_20 = arith.constant 0 : index
      %c0_21 = arith.constant 0 : index
      %25 = vector.load %arg5[%c0_19, %c0_20, %c0_21] : memref<1x1x128xf32, #tpu.memory_space<vmem>>, vector<1x1x128xf32>
      %26 = vector.shape_cast %25 : vector<1x1x128xf32> to vector<1x128xf32>
      %27 = vector.shape_cast %24 : vector<1x128xf32> to vector<1x1x128xf32>
      tpu.vector_store %arg5[%c0_19, %c0_20, %c0_21], %27 {strides = array<i32>} : memref<1x1x128xf32, #tpu.memory_space<vmem>>, vector<1x1x128xf32>,
    } else {
    }
    return
  }
  func.func @transform_0(%arg0: i32, %arg1: i32) -> (i32, i32, i32) {
    %c0_i32 = arith.constant 0 : i32
    %c0_i32_0 = arith.constant 0 : i32
    return %arg0, %arg1, %c0_i32 : i32, i32, i32
  }
  func.func @transform_1(%arg0: i32, %arg1: i32) -> (i32, i32) {
    %c0_i32 = arith.constant 0 : i32
    %c0_i32_0 = arith.constant 0 : i32
    %c0_i32_1 = arith.constant 0 : i32
    return %c0_i32, %c0_i32_0 : i32, i32
  }
  func.func @transform_2(%arg0: i32, %arg1: i32) -> (i32, i32) {
    %c0_i32 = arith.constant 0 : i32
    %c0_i32_0 = arith.constant 0 : i32
    %c0_i32_1 = arith.constant 0 : i32
    return %c0_i32, %c0_i32_0 : i32, i32
  }
  func.func @transform_3(%arg0: i32, %arg1: i32) -> (i32, i32, i32) {
    %c0_i32 = arith.constant 0 : i32
    %c0_i32_0 = arith.constant 0 : i32
    %c0_i32_1 = arith.constant 0 : i32
    return %arg0, %c0_i32, %c0_i32_0 : i32, i32, i32
  }
}

</mosaic_0001>

<llo_original>
// kernel: tpu_custom_call.1
$region0: #{tpu_custom_call.1}
  #allocation0 [shape = 'u32[]', space=smem, size = 0x4, offset = 0x4, fixed_abs, tag = 'smem constant byte address 0x4 - core index']
  #allocation1 [shape = 'u32[144,128]{1,0:T(1,128)}', space=vmem, size = 0x12000, scoped, tag = 'internal scratch']
  #allocation2 [shape = 'f32[8,128]{1,0:T(8,128)}', space=vmem, size = 0x1000, scoped, tag = 'scratch operand']
  %s0 = inlined_call_operand.hbm [shape: bf16[2,256,128], index: 0, kind: input, shape index: {}]
  %s1 = inlined_call_operand.hbm [shape: bf16[128,128], index: 1, kind: input, shape index: {}]
  %s2 = inlined_call_operand.vmem [shape: f32[1,128], index: 2, kind: input, shape index: {}]
  %s3 = inlined_call_operand.hbm [shape: f32[2,1,128], index: 3, kind: output, shape index: {}]
  %s4 = sld [smem:[#allocation0]]
  $region61: #{tpu_custom_call.1} parent=0
    _
  %s6 = ssub.s32 1, %s4
  %s7 = scalar_select 0, %s6, %s4
  $region1: #{tpu_custom_call.1} parent=0
    #allocation3 [shape = 'u8[131072]{0}', space=vmem, size = 0x20000, scoped, tag = 'input window, operand 0']
    #allocation4 [shape = 's32[2]{0}', space=sflag, size = 0x8, scoped, tag = 'scoped memory for tpu_custom_call.1']
    #allocation5 [shape = 's32[2]{0}', space=sflag, size = 0x8, scoped, tag = 'scoped memory for tpu_custom_call.1']
    #allocation6 [shape = 'u8[32768]{0}', space=vmem, size = 0x8000, scoped, tag = 'input window, operand 1, single buffered']
    #allocation7 [shape = 's32[1]{0}', space=sflag, size = 0x4, scoped, tag = 'scoped memory for tpu_custom_call.1']
    #allocation8 [shape = 'u8[1024]{0}', space=vmem, size = 0x400, scoped, tag = 'output window, operand 0']
    %8 = vsyncpa [#allocation4], 0
    %s9 = scalar_lea.sflag [#allocation4], 1
    %10 = vsyncpa %s9, 0
    %11 = vsyncpa [#allocation7], 0
    %12 = vsyncpa [#allocation5], 0
    %s13 = scalar_lea.sflag [#allocation5], 1
    %14 = vsyncpa %s13, 0
    loop: start=0, step=1, limit=4
    $region2: #{tpu_custom_call.1} parent=1 // loop_pre_header
      _
    $region3: #{tpu_custom_call.1} parent=1 // loop_header
      %s16 = sphi 0, %s20
      %p17 = scmp.ge.s32.totalorder %s16, 4
      %s23 = sphi 0, %s35
      %s24 = sphi 0, %s31
      %s25 = sphi 0, %s23
      %s26 = sphi 0, %s24
      %s27 = sphi 0, %s25
      %s28 = sphi 0, %s26
      %s40 = sphi 0, %s42
      %s43 = sphi 0, %s40
      %s44 = sphi 0, %s43
      %s60 = sphi 0, %s44
      %s64 = sphi 0, %s64
      %s66 = sphi 0, %s64
      %s67 = sphi 0, %s66
      %s81 = sphi 0, %s67
      %s85 = sphi 0, %s85
      %s87 = sphi 0, %s85
      %s88 = sphi 0, %s87
      %s102 = sphi 0, %s88
      %s108 = sphi 0, %s110
      %s111 = sphi 0, %s108
      %s112 = sphi 0, %s111
      %s128 = sphi 0, %s112
    $region4: #{tpu_custom_call.1} parent=1 // loop_header_branch
      %19 = sbr.rel (%p17) target = $region8
    $region5: #{tpu_custom_call.1} parent=1 // loop_body
      %s21 = ssub.s32 %s16, 1
      %s22 = ssub.s32 %s16, 2
      %s29 = sadd.s32 1, %s24
      %p30 = scmp.ge.s32.totalorder %s29, 1
      %s31 = scalar_select %p30, 0, %s29
      %s32 = sadd.s32 1, %s23
      %s33 = scalar_select %p30, %s32, %s23
      %p34 = scmp.ge.s32.totalorder %s33, 2
      %s35 = scalar_select %p34, 0, %s33
      %s36 = ssub.s32 %s23, %s35
      %s37 = ssub.s32 %s24, %s31
      %s38 = sor.u32 %s36, %s37
      %p39 = scmp.eq.s32.totalorder %s38, 0
      %s41 = sadd.s32 %s40, 1
      %s42 = scalar_select %p39, %s40, %s41
      %p45 = pneg %p39
      %p46 = scmp.eq.s32.totalorder %s16, 1
      %p47 = por %p45, %p46
      %p48 = scmp.ne.s32.totalorder %s40, %s43
      %p49 = scmp.eq.s32.totalorder %s16, 0
      %p50 = por %p48, %p49
      %p51 = scmp.ne.s32.totalorder %s40, %s43
      %p52 = scmp.eq.s32.totalorder %s21, 1
      %p53 = por %p51, %p52
      %p54 = scmp.ne.s32.totalorder %s43, %s44
      %p55 = scmp.eq.s32.totalorder %s21, 0
      %p56 = por %p54, %p55
      %p57 = scmp.ne.s32.totalorder %s43, %s44
      %p58 = scmp.eq.s32.totalorder %s22, 1
      %p59 = por %p57, %p58
      %p61 = scmp.ne.s32.totalorder %s44, %s60
      %p62 = scmp.eq.s32.totalorder %s22, 0
      %p63 = por %p61, %p62
      %s65 = sadd.s32 %s64, 1
      %p68 = scmp.eq.s32.totalorder %s16, 1
      %p69 = scmp.ne.s32.totalorder %s64, %s66
      %p70 = scmp.eq.s32.totalorder %s16, 0
      %p71 = por %p69, %p70
      %p72 = scmp.ne.s32.totalorder %s64, %s66
      %p73 = scmp.eq.s32.totalorder %s21, 1
      %p74 = por %p72, %p73
      %p75 = scmp.ne.s32.totalorder %s66, %s67
      %p76 = scmp.eq.s32.totalorder %s21, 0
      %p77 = por %p75, %p76
      %p78 = scmp.ne.s32.totalorder %s66, %s67
      %p79 = scmp.eq.s32.totalorder %s22, 1
      %p80 = por %p78, %p79
      %p82 = scmp.ne.s32.totalorder %s67, %s81
      %p83 = scmp.eq.s32.totalorder %s22, 0
      %p84 = por %p82, %p83
      %s86 = sadd.s32 %s85, 1
      %p89 = scmp.eq.s32.totalorder %s16, 1
      %p90 = scmp.ne.s32.totalorder %s85, %s87
      %p91 = scmp.eq.s32.totalorder %s16, 0
      %p92 = por %p90, %p91
      %p93 = scmp.ne.s32.totalorder %s85, %s87
      %p94 = scmp.eq.s32.totalorder %s21, 1
      %p95 = por %p93, %p94
      %p96 = scmp.ne.s32.totalorder %s87, %s88
      %p97 = scmp.eq.s32.totalorder %s21, 0
      %p98 = por %p96, %p97
      %p99 = scmp.ne.s32.totalorder %s87, %s88
      %p100 = scmp.eq.s32.totalorder %s22, 1
      %p101 = por %p99, %p100
      %p103 = scmp.ne.s32.totalorder %s88, %s102
      %p104 = scmp.eq.s32.totalorder %s22, 0
      %p105 = por %p103, %p104
      %s106 = ssub.s32 %s23, %s35
      %p107 = scmp.eq.s32.totalorder %s106, 0
      %s109 = sadd.s32 %s108, 1
      %s110 = scalar_select %p107, %s108, %s109
      %p113 = pneg %p107
      %p114 = scmp.eq.s32.totalorder %s16, 1
      %p115 = por %p113, %p114
      %p116 = scmp.ne.s32.totalorder %s108, %s111
      %p117 = scmp.eq.s32.totalorder %s16, 0
      %p118 = por %p116, %p117
      %p119 = scmp.ne.s32.totalorder %s108, %s111
      %p120 = scmp.eq.s32.totalorder %s21, 1
      %p121 = por %p119, %p120
      %p122 = scmp.ne.s32.totalorder %s111, %s112
      %p123 = scmp.eq.s32.totalorder %s21, 0
      %p124 = por %p122, %p123
      %p125 = scmp.ne.s32.totalorder %s111, %s112
      %p126 = scmp.eq.s32.totalorder %s22, 1
      %p127 = por %p125, %p126
      %p129 = scmp.ne.s32.totalorder %s112, %s128
      %p130 = scmp.eq.s32.totalorder %s22, 0
      %p131 = por %p129, %p130
      %p132 = scmp.le.s32.totalorder 1, %s16
      %p133 = scmp.lt.s32.totalorder %s16, 3
      %p134 = pnand %p132, %p133
      %p135 = pneg %p134
      // Predicated region
      $region9: #{tpu_custom_call.1} parent=5 // pred_check
        _
      $region10: #{tpu_custom_call.1} parent=5 // pred_check_branch
        %137 = sbr.rel (%p134) target = $region12
      $region11: #{tpu_custom_call.1} parent=5 // pred_region
        %s138 = ssub.s32 %s16, 1
        // Predicated region
        $region13: #{tpu_custom_call.1} parent=11 // pred_check
          %p139 = pneg %p77
        $region14: #{tpu_custom_call.1} parent=11 // pred_check_branch
          %141 = sbr.rel (%p139) target = $region16
        $region15: #{tpu_custom_call.1} parent=11 // pred_region
          %s143 = ssub.s32 1024, 1024
          %144 = vsyncadd [#allocation7], %s143
          %s145 = sshll.u32 [#allocation6], 4
          %s146 = int_to_ptr.vmem [resolvable:$true] %s145
          %151 = dma.hbm_to_vmem [thread:$0]  %s1, 1024, %s146, [#allocation7], 64, 64, 4
        $region16: #{tpu_custom_call.1} parent=11 // pred_fallthru
          _
        // Predicated region
        $region17: #{tpu_custom_call.1} parent=11 // pred_check
          %p152 = pneg %p98
        $region18: #{tpu_custom_call.1} parent=11 // pred_check_branch
          %154 = sbr.rel (%p152) target = $region20
        $region19: #{tpu_custom_call.1} parent=11 // pred_region
          _
        $region20: #{tpu_custom_call.1} parent=11 // pred_fallthru
          _
      $region12: #{tpu_custom_call.1} parent=5 // pred_fallthru
        _
      %p155 = scmp.lt.s32.totalorder %s16, 2
      // Predicated region
      $region21: #{tpu_custom_call.1} parent=5 // pred_check
        %p156 = pneg %p155
      $region22: #{tpu_custom_call.1} parent=5 // pred_check_branch
        %158 = sbr.rel (%p156) target = $region24
      $region23: #{tpu_custom_call.1} parent=5 // pred_region
        // Predicated region
        $region25: #{tpu_custom_call.1} parent=23 // pred_check
          %p159 = pneg %p50
        $region26: #{tpu_custom_call.1} parent=23 // pred_check_branch
          %161 = sbr.rel (%p159) target = $region28
        $region27: #{tpu_custom_call.1} parent=23 // pred_region
          %s162 = sand.u32 %s40, 1
          %s163 = scalar_lea.sflag [#allocation4], %s162
          %s164 = sand.u32 %s40, 1
          %s165 = smul.addr %s164, 128
          %s166 = scalar_lea.vmem [#allocation3], %s165
          %s167 = smul.u32 32, %s24
          %s169 = ssub.s32 2048, 2048
          %170 = vsyncadd %s163, %s169
          %s171 = smul.addr %s23, 32
          %s172 = sadd.s32 %s167, %s171
          %s173 = smul.addr %s172, 64
          %s174 = scalar_lea.hbm %s0, %s173
          %s175 = sshll.u32 %s166, 4
          %s176 = int_to_ptr.vmem [resolvable:$true] %s175
          %181 = dma.hbm_to_vmem [thread:$0]  %s174, 2048, %s176, %s163, 64, 64, 4
        $region28: #{tpu_custom_call.1} parent=23 // pred_fallthru
          _
      $region24: #{tpu_custom_call.1} parent=5 // pred_fallthru
        _
      %p182 = scmp.le.s32.totalorder 1, %s16
      %p183 = scmp.lt.s32.totalorder %s16, 3
      %p184 = pnand %p182, %p183
      %p185 = pneg %p184
      // Predicated region
      $region29: #{tpu_custom_call.1} parent=5 // pred_check
        _
      $region30: #{tpu_custom_call.1} parent=5 // pred_check_branch
        %187 = sbr.rel (%p184) target = $region32
      $region31: #{tpu_custom_call.1} parent=5 // pred_region
        %s188 = ssub.s32 %s16, 1
        %s189 = sand.u32 %s43, 1
        %s190 = scalar_lea.sflag [#allocation4], %s189
        %s191 = sand.u32 %s43, 1
        %s192 = smul.addr %s191, 128
        %s193 = scalar_lea.vmem [#allocation3], %s192
        // Predicated region
        $region33: #{tpu_custom_call.1} parent=31 // pred_check
          %p194 = pneg %p56
        $region34: #{tpu_custom_call.1} parent=31 // pred_check_branch
          %196 = sbr.rel (%p194) target = $region36
        $region35: #{tpu_custom_call.1} parent=31 // pred_region
          %197 = dma.done %s190, 2048
        $region36: #{tpu_custom_call.1} parent=31 // pred_fallthru
          _
        // Predicated region
        $region37: #{tpu_custom_call.1} parent=31 // pred_check
          %p198 = pneg %p77
        $region38: #{tpu_custom_call.1} parent=31 // pred_check_branch
          %200 = sbr.rel (%p198) target = $region40
        $region39: #{tpu_custom_call.1} parent=31 // pred_region
          %201 = dma.done [#allocation7], 1024
        $region40: #{tpu_custom_call.1} parent=31 // pred_fallthru
          _
        %s202 = sand.u32 %s43, 1
        %s203 = scalar_lea.sflag [#allocation4], %s202
        %s204 = sand.u32 %s43, 1
        %s205 = smul.addr %s204, 128
        %s206 = scalar_lea.vmem [#allocation3], %s205
        %p207 = pneg %p56
        %p208 = pneg %p53
        %p209 = pneg %p77
        %p210 = pneg %p74
        %p211 = pneg %p98
        %p212 = pneg %p95
        %p213 = pneg %p124
        %p214 = pneg %p121
        %s215 = sand.u32 %s111, 1
        %s216 = scalar_lea.sflag [#allocation5], %s215
        %s217 = sand.u32 %s111, 1
        %s218 = scalar_lea.vmem [#allocation8], %s217
        %s219 = smul.u32 32, %s26
        %p221 = scmp.eq.s32.totalorder %s26, 0
        // Predicated region
        $region41: #{tpu_custom_call.1} parent=31 // pred_check
          %p222 = pneg %p221
        $region42: #{tpu_custom_call.1} parent=31 // pred_check_branch
          %224 = sbr.rel (%p222) target = $region44
        $region43: #{tpu_custom_call.1} parent=31 // pred_region
          %225 = vst [vmem:[#allocation2] sm:$0xff] 0.0
        $region44: #{tpu_custom_call.1} parent=31 // pred_fallthru
          _
        %v226 = vld [vmem:[%s193] sm:$0xf]
        %v227 = vld [vmem:[%s193 + $0x4] sm:$0xf]
        %v228 = vld [vmem:[%s193 + $0x8] sm:$0xf]
        %v229 = vld [vmem:[%s193 + $0xc] sm:$0xf]
        %v230 = vld [vmem:[%s193 + $0x10] sm:$0xf]
        %v231 = vld [vmem:[%s193 + $0x14] sm:$0xf]
        %v232 = vld [vmem:[%s193 + $0x18] sm:$0xf]
        %v233 = vld [vmem:[%s193 + $0x1c] sm:$0xf]
        %v234 = vld [vmem:[%s193 + $0x20] sm:$0xf]
        %v235 = vld [vmem:[%s193 + $0x24] sm:$0xf]
        %v236 = vld [vmem:[%s193 + $0x28] sm:$0xf]
        %v237 = vld [vmem:[%s193 + $0x2c] sm:$0xf]
        %v238 = vld [vmem:[%s193 + $0x30] sm:$0xf]
        %v239 = vld [vmem:[%s193 + $0x34] sm:$0xf]
        %v240 = vld [vmem:[%s193 + $0x38] sm:$0xf]
        %v241 = vld [vmem:[%s193 + $0x3c] sm:$0xf]
        %v242 = vld [vmem:[%s193 + $0x40] sm:$0xf]
        %v243 = vld [vmem:[%s193 + $0x44] sm:$0xf]
        %v244 = vld [vmem:[%s193 + $0x48] sm:$0xf]
        %v245 = vld [vmem:[%s193 + $0x4c] sm:$0xf]
        %v246 = vld [vmem:[%s193 + $0x50] sm:$0xf]
        %v247 = vld [vmem:[%s193 + $0x54] sm:$0xf]
        %v248 = vld [vmem:[%s193 + $0x58] sm:$0xf]
        %v249 = vld [vmem:[%s193 + $0x5c] sm:$0xf]
        %v250 = vld [vmem:[%s193 + $0x60] sm:$0xf]
        %v251 = vld [vmem:[%s193 + $0x64] sm:$0xf]
        %v252 = vld [vmem:[%s193 + $0x68] sm:$0xf]
        %v253 = vld [vmem:[%s193 + $0x6c] sm:$0xf]
        %v254 = vld [vmem:[%s193 + $0x70] sm:$0xf]
        %v255 = vld [vmem:[%s193 + $0x74] sm:$0xf]
        %v256 = vld [vmem:[%s193 + $0x78] sm:$0xf]
        %v257 = vld [vmem:[%s193 + $0x7c] sm:$0xf]
        %v258 = vld [vmem:[#allocation6] sm:$0xf]
        %v259 = vld [vmem:[#allocation6 + $0x4] sm:$0xf]
        %v260 = vld [vmem:[#allocation6 + $0x8] sm:$0xf]
        %v261 = vld [vmem:[#allocation6 + $0xc] sm:$0xf]
        %v262 = vld [vmem:[#allocation6 + $0x10] sm:$0xf]
        %v263 = vld [vmem:[#allocation6 + $0x14] sm:$0xf]
        %v264 = vld [vmem:[#allocation6 + $0x18] sm:$0xf]
        %v265 = vld [vmem:[#allocation6 + $0x1c] sm:$0xf]
        %v266 = vld [vmem:[#allocation6 + $0x20] sm:$0xf]
        %v267 = vld [vmem:[#allocation6 + $0x24] sm:$0xf]
        %v268 = vld [vmem:[#allocation6 + $0x28] sm:$0xf]
        %v269 = vld [vmem:[#allocation6 + $0x2c] sm:$0xf]
        %v270 = vld [vmem:[#allocation6 + $0x30] sm:$0xf]
        %v271 = vld [vmem:[#allocation6 + $0x34] sm:$0xf]
        %v272 = vld [vmem:[#allocation6 + $0x38] sm:$0xf]
        %v273 = vld [vmem:[#allocation6 + $0x3c] sm:$0xf]
        %v274 = vld [vmem:[%s2] sm:$0x1]
        %v276 = vlaneseq
        %v277 = vshrl.u32 %v276, 7
        %v278 = vsub.s32 0, %v277
        %v279 = vrot.slane %v274, %v278
        %v313 = vunpack.c.l.b16 %v226
        %v314 = vunpack.c.l.b16 %v227
        %v315 = vunpack.c.l.b16 %v228
        %v316 = vunpack.c.l.b16 %v229
        %v317 = vunpack.c.l.b16 %v230
        %v318 = vunpack.c.l.b16 %v231
        %v319 = vunpack.c.l.b16 %v232
        %v320 = vunpack.c.l.b16 %v233
        %v321 = vunpack.c.l.b16 %v234
        %v322 = vunpack.c.l.b16 %v235
        %v323 = vunpack.c.l.b16 %v236
        %v324 = vunpack.c.l.b16 %v237
        %v325 = vunpack.c.l.b16 %v238
        %v326 = vunpack.c.l.b16 %v239
        %v327 = vunpack.c.l.b16 %v240
        %v328 = vunpack.c.l.b16 %v241
        %v329 = vunpack.c.l.b16 %v242
        %v330 = vunpack.c.l.b16 %v243
        %v331 = vunpack.c.l.b16 %v244
        %v332 = vunpack.c.l.b16 %v245
        %v333 = vunpack.c.l.b16 %v246
        %v334 = vunpack.c.l.b16 %v247
        %v335 = vunpack.c.l.b16 %v248
        %v336 = vunpack.c.l.b16 %v249
        %v337 = vunpack.c.l.b16 %v250
        %v338 = vunpack.c.l.b16 %v251
        %v339 = vunpack.c.l.b16 %v252
        %v340 = vunpack.c.l.b16 %v253
        %v341 = vunpack.c.l.b16 %v254
        %v342 = vunpack.c.l.b16 %v255
        %v343 = vunpack.c.l.b16 %v256
        %v344 = vunpack.c.l.b16 %v257
        %v345 = vpack.c.b16 %v314, %v313
        %v346 = vpack.c.b16 %v316, %v315
        %v347 = vpack.c.b16 %v318, %v317
        %v348 = vpack.c.b16 %v320, %v319
        %v349 = vpack.c.b16 %v322, %v321
        %v350 = vpack.c.b16 %v324, %v323
        %v351 = vpack.c.b16 %v326, %v325
        %v352 = vpack.c.b16 %v328, %v327
        %v353 = vpack.c.b16 %v330, %v329
        %v354 = vpack.c.b16 %v332, %v331
        %v355 = vpack.c.b16 %v334, %v333
        %v356 = vpack.c.b16 %v336, %v335
        %v357 = vpack.c.b16 %v338, %v337
        %v358 = vpack.c.b16 %v340, %v339
        %v359 = vpack.c.b16 %v342, %v341
        %v360 = vpack.c.b16 %v344, %v343
        %v393 = vunpack.c.l.b16 %v258
        %v394 = vunpack.c.l.b16 %v259
        %v395 = vunpack.c.l.b16 %v260
        %v396 = vunpack.c.l.b16 %v261
        %v397 = vunpack.c.l.b16 %v262
        %v398 = vunpack.c.l.b16 %v263
        %v399 = vunpack.c.l.b16 %v264
        %v400 = vunpack.c.l.b16 %v265
        %v401 = vunpack.c.l.b16 %v266
        %v402 = vunpack.c.l.b16 %v267
        %v403 = vunpack.c.l.b16 %v268
        %v404 = vunpack.c.l.b16 %v269
        %v405 = vunpack.c.l.b16 %v270
        %v406 = vunpack.c.l.b16 %v271
        %v407 = vunpack.c.l.b16 %v272
        %v408 = vunpack.c.l.b16 %v273
        %v409 = vpack.c.b16 %v394, %v393
        %v410 = vpack.c.b16 %v396, %v395
        %v411 = vpack.c.b16 %v398, %v397
        %v412 = vpack.c.b16 %v400, %v399
        %v413 = vpack.c.b16 %v402, %v401
        %v414 = vpack.c.b16 %v404, %v403
        %v415 = vpack.c.b16 %v406, %v405
        %v416 = vpack.c.b16 %v408, %v407
        %425 = vmatprep.subr.bf16.mxu0 0
        %426 = vmatpush1.bf16.msra.mxu0 %v416
        %427 = vmatprep.subr.bf16.mxu0 0
        %428 = vmatpush1.bf16.msra.mxu0 %v415
        %429 = vmatprep.subr.bf16.mxu0 0
        %430 = vmatpush1.bf16.msra.mxu0 %v414
        %431 = vmatprep.subr.bf16.mxu0 0
        %432 = vmatpush1.bf16.msra.mxu0 %v413
        %433 = vmatprep.subr.bf16.mxu0 0
        %434 = vmatpush1.bf16.msra.mxu0 %v412
        %435 = vmatprep.subr.bf16.mxu0 0
        %436 = vmatpush1.bf16.msra.mxu0 %v411
        %437 = vmatprep.subr.bf16.mxu0 0
        %438 = vmatpush1.bf16.msra.mxu0 %v410
        %439 = vmatprep.subr.bf16.mxu0 0
        %440 = vmatpush1.bf16.msra.mxu0 %v409
        %441 = vmatprep.subr.bf16.mxu0 0
        %442 = vmatpush2.bf16.msra.mxu0 0
        %443 = vmatprep.subr.bf16.mxu0 0
        %444 = vmatpush2.bf16.msra.mxu0 0
        %445 = vmatprep.subr.bf16.mxu0 0
        %446 = vmatpush2.bf16.msra.mxu0 0
        %447 = vmatprep.subr.bf16.mxu0 0
        %448 = vmatpush2.bf16.msra.mxu0 0
        %449 = vmatprep.subr.bf16.mxu0 0
        %450 = vmatpush2.bf16.msra.mxu0 0
        %451 = vmatprep.subr.bf16.mxu0 0
        %452 = vmatpush2.bf16.msra.mxu0 0
        %453 = vmatprep.subr.bf16.mxu0 0
        %454 = vmatpush2.bf16.msra.mxu0 0
        %455 = vmatprep.subr.bf16.mxu0 0
        %456 = vmatpush2.bf16.msra.mxu0 0
        %457 = vmatprep.mubr.bf16.mxu0 0
        %458 = vmatmul.mubr.bf16.gmra.mxu0 %v345
        %v459 = vpop.f32.mrf.mxu0
        %v460 = vadd.f32 %v279, %v459
        %v461 = vpop.f32.mrf.mxu0
        %v462 = vpop.f32.mrf.mxu0
        %v463 = vadd.f32 %v279, %v462
        %v464 = vpop.f32.mrf.mxu0
        %465 = vmatprep.mubr.bf16.mxu0 0
        %466 = vmatmul.mubr.bf16.gmra.mxu0 %v346
        %v467 = vpop.f32.mrf.mxu0
        %v468 = vadd.f32 %v279, %v467
        %v469 = vpop.f32.mrf.mxu0
        %v470 = vpop.f32.mrf.mxu0
        %v471 = vadd.f32 %v279, %v470
        %v472 = vpop.f32.mrf.mxu0
        %473 = vmatprep.mubr.bf16.mxu0 0
        %474 = vmatmul.mubr.bf16.gmra.mxu0 %v347
        %v475 = vpop.f32.mrf.mxu0
        %v476 = vadd.f32 %v279, %v475
        %v477 = vpop.f32.mrf.mxu0
        %v478 = vpop.f32.mrf.mxu0
        %v479 = vadd.f32 %v279, %v478
        %v480 = vpop.f32.mrf.mxu0
        %481 = vmatprep.mubr.bf16.mxu0 0
        %482 = vmatmul.mubr.bf16.gmra.mxu0 %v348
        %v483 = vpop.f32.mrf.mxu0
        %v484 = vadd.f32 %v279, %v483
        %v485 = vpop.f32.mrf.mxu0
        %v486 = vpop.f32.mrf.mxu0
        %v487 = vadd.f32 %v279, %v486
        %v488 = vpop.f32.mrf.mxu0
        %489 = vmatprep.mubr.bf16.mxu0 0
        %490 = vmatmul.mubr.bf16.gmra.mxu0 %v349
        %v491 = vpop.f32.mrf.mxu0
        %v492 = vadd.f32 %v279, %v491
        %v493 = vpop.f32.mrf.mxu0
        %v494 = vpop.f32.mrf.mxu0
        %v495 = vadd.f32 %v279, %v494
        %v496 = vpop.f32.mrf.mxu0
        %497 = vmatprep.mubr.bf16.mxu0 0
        %498 = vmatmul.mubr.bf16.gmra.mxu0 %v350
        %v499 = vpop.f32.mrf.mxu0
        %v500 = vadd.f32 %v279, %v499
        %v501 = vpop.f32.mrf.mxu0
        %v502 = vpop.f32.mrf.mxu0
        %v503 = vadd.f32 %v279, %v502
        %v504 = vpop.f32.mrf.mxu0
        %505 = vmatprep.mubr.bf16.mxu0 0
        %506 = vmatmul.mubr.bf16.gmra.mxu0 %v351
        %v507 = vpop.f32.mrf.mxu0
        %v508 = vadd.f32 %v279, %v507
        %v509 = vpop.f32.mrf.mxu0
        %v510 = vpop.f32.mrf.mxu0
        %v511 = vadd.f32 %v279, %v510
        %v512 = vpop.f32.mrf.mxu0
        %513 = vmatprep.mubr.bf16.mxu0 0
        %514 = vmatmul.mubr.bf16.gmra.mxu0 %v352
        %v515 = vpop.f32.mrf.mxu0
        %v516 = vadd.f32 %v279, %v515
        %v517 = vpop.f32.mrf.mxu0
        %v518 = vpop.f32.mrf.mxu0
        %v519 = vadd.f32 %v279, %v518
        %v520 = vpop.f32.mrf.mxu0
        %521 = vmatprep.mubr.bf16.mxu0 0
        %522 = vmatmul.mubr.bf16.gmra.mxu0 %v353
        %v523 = vpop.f32.mrf.mxu0
        %v524 = vadd.f32 %v279, %v523
        %v525 = vpop.f32.mrf.mxu0
        %v526 = vpop.f32.mrf.mxu0
        %v527 = vadd.f32 %v279, %v526
        %v528 = vpop.f32.mrf.mxu0
        %529 = vmatprep.mubr.bf16.mxu0 0
        %530 = vmatmul.mubr.bf16.gmra.mxu0 %v354
        %v531 = vpop.f32.mrf.mxu0
        %v532 = vadd.f32 %v279, %v531
        %v533 = vpop.f32.mrf.mxu0
        %v534 = vpop.f32.mrf.mxu0
        %v535 = vadd.f32 %v279, %v534
        %v536 = vpop.f32.mrf.mxu0
        %537 = vmatprep.mubr.bf16.mxu0 0
        %538 = vmatmul.mubr.bf16.gmra.mxu0 %v355
        %v539 = vpop.f32.mrf.mxu0
        %v540 = vadd.f32 %v279, %v539
        %v541 = vpop.f32.mrf.mxu0
        %v542 = vpop.f32.mrf.mxu0
        %v543 = vadd.f32 %v279, %v542
        %v544 = vpop.f32.mrf.mxu0
        %545 = vmatprep.mubr.bf16.mxu0 0
        %546 = vmatmul.mubr.bf16.gmra.mxu0 %v356
        %v547 = vpop.f32.mrf.mxu0
        %v548 = vadd.f32 %v279, %v547
        %v549 = vpop.f32.mrf.mxu0
        %v550 = vpop.f32.mrf.mxu0
        %v551 = vadd.f32 %v279, %v550
        %v552 = vpop.f32.mrf.mxu0
        %553 = vmatprep.mubr.bf16.mxu0 0
        %554 = vmatmul.mubr.bf16.gmra.mxu0 %v357
        %v555 = vpop.f32.mrf.mxu0
        %v556 = vadd.f32 %v279, %v555
        %v557 = vpop.f32.mrf.mxu0
        %v558 = vpop.f32.mrf.mxu0
        %v559 = vadd.f32 %v279, %v558
        %v560 = vpop.f32.mrf.mxu0
        %561 = vmatprep.mubr.bf16.mxu0 0
        %562 = vmatmul.mubr.bf16.gmra.mxu0 %v358
        %v563 = vpop.f32.mrf.mxu0
        %v564 = vadd.f32 %v279, %v563
        %v565 = vpop.f32.mrf.mxu0
        %v566 = vpop.f32.mrf.mxu0
        %v567 = vadd.f32 %v279, %v566
        %v568 = vpop.f32.mrf.mxu0
        %569 = vmatprep.mubr.bf16.mxu0 0
        %570 = vmatmul.mubr.bf16.gmra.mxu0 %v359
        %v571 = vpop.f32.mrf.mxu0
        %v572 = vadd.f32 %v279, %v571
        %v573 = vpop.f32.mrf.mxu0
        %v574 = vpop.f32.mrf.mxu0
        %v575 = vadd.f32 %v279, %v574
        %v576 = vpop.f32.mrf.mxu0
        %577 = vmatprep.mubr.bf16.mxu0 0
        %578 = vmatmul.mubr.bf16.gmra.mxu0 %v360
        %v579 = vpop.f32.mrf.mxu0
        %v580 = vadd.f32 %v279, %v579
        %v581 = vpop.f32.mrf.mxu0
        %v582 = vpop.f32.mrf.mxu0
        %v583 = vadd.f32 %v279, %v582
        %v584 = vpop.f32.mrf.mxu0
        %585 = vdwg.mxu0
        %v586 = vmax.f32 %v460, 0.0
        %v587 = vmax.f32 %v463, 0.0
        %v588 = vmax.f32 %v468, 0.0
        %v589 = vmax.f32 %v471, 0.0
        %v590 = vmax.f32 %v476, 0.0
        %v591 = vmax.f32 %v479, 0.0
        %v592 = vmax.f32 %v484, 0.0
        %v593 = vmax.f32 %v487, 0.0
        %v594 = vmax.f32 %v492, 0.0
        %v595 = vmax.f32 %v495, 0.0
        %v596 = vmax.f32 %v500, 0.0
        %v597 = vmax.f32 %v503, 0.0
        %v598 = vmax.f32 %v508, 0.0
        %v599 = vmax.f32 %v511, 0.0
        %v600 = vmax.f32 %v516, 0.0
        %v601 = vmax.f32 %v519, 0.0
        %v602 = vmax.f32 %v524, 0.0
        %v603 = vmax.f32 %v527, 0.0
        %v604 = vmax.f32 %v532, 0.0
        %v605 = vmax.f32 %v535, 0.0
        %v606 = vmax.f32 %v540, 0.0
        %v607 = vmax.f32 %v543, 0.0
        %v608 = vmax.f32 %v548, 0.0
        %v609 = vmax.f32 %v551, 0.0
        %v610 = vmax.f32 %v556, 0.0
        %v611 = vmax.f32 %v559, 0.0
        %v612 = vmax.f32 %v564, 0.0
        %v613 = vmax.f32 %v567, 0.0
        %v614 = vmax.f32 %v572, 0.0
        %v615 = vmax.f32 %v575, 0.0
        %v616 = vmax.f32 %v580, 0.0
        %v617 = vmax.f32 %v583, 0.0
        %v618 = vld [vmem:[#allocation2] sm:$0xff]
        %v619 = vadd.f32 %v586, %v587
        %v620 = vadd.f32 %v619, %v588
        %v621 = vadd.f32 %v620, %v589
        %v622 = vadd.f32 %v621, %v590
        %v623 = vadd.f32 %v622, %v591
        %v624 = vadd.f32 %v623, %v592
        %v625 = vadd.f32 %v624, %v593
        %v626 = vadd.f32 %v625, %v594
        %v627 = vadd.f32 %v626, %v595
        %v628 = vadd.f32 %v627, %v596
        %v629 = vadd.f32 %v628, %v597
        %v630 = vadd.f32 %v629, %v598
        %v631 = vadd.f32 %v630, %v599
        %v632 = vadd.f32 %v631, %v600
        %v633 = vadd.f32 %v632, %v601
        %v634 = vadd.f32 %v633, %v602
        %v635 = vadd.f32 %v634, %v603
        %v636 = vadd.f32 %v635, %v604
        %v637 = vadd.f32 %v636, %v605
        %v638 = vadd.f32 %v637, %v606
        %v639 = vadd.f32 %v638, %v607
        %v640 = vadd.f32 %v639, %v608
        %v641 = vadd.f32 %v640, %v609
        %v642 = vadd.f32 %v641, %v610
        %v643 = vadd.f32 %v642, %v611
        %v644 = vadd.f32 %v643, %v612
        %v645 = vadd.f32 %v644, %v613
        %v646 = vadd.f32 %v645, %v614
        %v647 = vadd.f32 %v646, %v615
        %v648 = vadd.f32 %v647, %v616
        %v649 = vadd.f32 %v648, %v617
        %v650 = vadd.f32 %v618, %v649
        %651 = vst [vmem:[#allocation2] sm:$0xff] %v650
        // Predicated region
        $region45: #{tpu_custom_call.1} parent=31 // pred_check
          %p652 = pneg %p221
        $region46: #{tpu_custom_call.1} parent=31 // pred_check_branch
          %654 = sbr.rel (%p652) target = $region48
        $region47: #{tpu_custom_call.1} parent=31 // pred_region
          %v655 = vld [vmem:[#allocation2] sm:$0xff]
          %v656 = vrot.slane %v655, 4
          %v657 = vadd.f32 %v655, %v656
          %v658 = vrot.slane %v657, 2
          %v659 = vadd.f32 %v657, %v658
          %v660 = vrot.slane %v659, 1
          %v661 = vadd.f32 %v659, %v660
          %v662 = vmul.f32 %v661, 0.00390625
          %663 = vst [vmem:[%s218] sm:$0x1] %v662
        $region48: #{tpu_custom_call.1} parent=31 // pred_fallthru
          _
        %s664 = sand.u32 %s111, 1
        %s665 = scalar_lea.sflag [#allocation5], %s664
        %s666 = sand.u32 %s111, 1
        %s667 = scalar_lea.vmem [#allocation8], %s666
        // Predicated region
        $region49: #{tpu_custom_call.1} parent=31 // pred_check
          %p668 = pneg %p121
        $region50: #{tpu_custom_call.1} parent=31 // pred_check_branch
          %670 = sbr.rel (%p668) target = $region52
        $region51: #{tpu_custom_call.1} parent=31 // pred_region
          %s672 = ssub.s32 16, 16
          %673 = vsyncadd %s665, %s672
          %s674 = smul.addr %s25, 16
          %s675 = scalar_lea.hbm %s3, %s674
          %s677 = sshll.u32 %s667, 4
          %s678 = int_to_ptr.vmem [resolvable:$true] %s677
          %680 = dma.vmem_to_hbm [thread:$0]  %s678, 16, %s675, %s665
        $region52: #{tpu_custom_call.1} parent=31 // pred_fallthru
          _
      $region32: #{tpu_custom_call.1} parent=5 // pred_fallthru
        _
      %p681 = scmp.le.s32.totalorder 2, %s16
      // Predicated region
      $region53: #{tpu_custom_call.1} parent=5 // pred_check
        %p682 = pneg %p681
      $region54: #{tpu_custom_call.1} parent=5 // pred_check_branch
        %684 = sbr.rel (%p682) target = $region56
      $region55: #{tpu_custom_call.1} parent=5 // pred_region
        %s685 = ssub.s32 %s16, 2
        // Predicated region
        $region57: #{tpu_custom_call.1} parent=55 // pred_check
          %p686 = pneg %p127
        $region58: #{tpu_custom_call.1} parent=55 // pred_check_branch
          %688 = sbr.rel (%p686) target = $region60
        $region59: #{tpu_custom_call.1} parent=55 // pred_region
          %s689 = sand.u32 %s112, 1
          %s690 = scalar_lea.sflag [#allocation5], %s689
          %s691 = sand.u32 %s112, 1
          %s692 = scalar_lea.vmem [#allocation8], %s691
          %693 = dma.done %s690, 16
        $region60: #{tpu_custom_call.1} parent=55 // pred_fallthru
          _
      $region56: #{tpu_custom_call.1} parent=5 // pred_fallthru
        _
    $region6: #{tpu_custom_call.1} parent=1 // loop_footer
      %s20 = sadd.s32 1, %s16
    $region7: #{tpu_custom_call.1} parent=1 // loop_footer_branch
      %15 = sbr.rel target = $region3
    $region8: #{tpu_custom_call.1} parent=1 // loop_exit
      _
    %694 = vsyncpa [#allocation4], 1
    %s695 = scalar_lea.sflag [#allocation4], 1
    %696 = vsyncpa %s695, 1
    %697 = vsyncpa [#allocation7], 1
    %698 = vsyncpa [#allocation5], 1
    %s699 = scalar_lea.sflag [#allocation5], 1
    %700 = vsyncpa %s699, 1

</llo_original>
